<compile_context>
chip_gen: v5e
topology: v5e:2x2
jax: 0.10.0
libtpu: 0.0.40
codegen_flags: <defaults>
</compile_context>

<pallas_src>
import jax
import jax.numpy as jnp
from jax.experimental import pallas as pl
from jax.experimental.pallas import tpu as pltpu


def _round_up(a, b):
    return ((a + b - 1) // b) * b


# ----------------------------------------------------------------------------
# Kernels
# ----------------------------------------------------------------------------
def _lora_qkv_kernel(x_ref, wq_ref, wk_ref, wv_ref, bias_ref,
                     a_qv_ref, bq_ref, bv_ref, out_ref):
    """One M-tile of:
         qkv = x @ Wqkv + b
         qkv[:, :dim]  += (x @ Aq) @ Bq
         qkv[:, -dim:] += (x @ Av) @ Bv
       computed as three per-segment (tm, dim) accumulators (Q, K, V).
       LoRA-A is fused ([Aq|Av]); LoRA-B is split (no block-diag zero work)."""
    dim = wq_ref.shape[1]                               # static
    r = bq_ref.shape[0]                                 # static
    cdt = wq_ref.dtype
    x = x_ref[...].astype(cdt)                          # in-kernel cast, (tm, dim)
    bias = bias_ref[...]                                # (1, 3*dim) f32

    # Fused LoRA-A matmul: one (dim, 2r) dot instead of two rank-r dots.
    h = jnp.dot(x, a_qv_ref[...], preferred_element_type=jnp.float32)   # (tm, 2r)
    h = h.astype(cdt)

    # Q segment (+ LoRA Q)
    q = jnp.dot(x, wq_ref[...], preferred_element_type=jnp.float32)
    new_q = jnp.dot(h[:, :r], bq_ref[...], preferred_element_type=jnp.float32)
    out_ref[:, :dim] = (q + bias[:, :dim] + new_q).astype(out_ref.dtype)

    # K segment (no LoRA)
    k = jnp.dot(x, wk_ref[...], preferred_element_type=jnp.float32)
    out_ref[:, dim:2 * dim] = (k + bias[:, dim:2 * dim]).astype(out_ref.dtype)

    # V segment (+ LoRA V)
    v = jnp.dot(x, wv_ref[...], preferred_element_type=jnp.float32)
    new_v = jnp.dot(h[:, r:], bv_ref[...], preferred_element_type=jnp.float32)
    out_ref[:, 2 * dim:] = (v + bias[:, 2 * dim:] + new_v).astype(out_ref.dtype)


def _qkv_merged_kernel(x_ref, wq_ref, wk_ref, wv_ref, bias_ref, out_ref):
    """Inference path: LoRA already folded into Wq / Wv -> pure GEMM + bias."""
    dim = wq_ref.shape[1]
    x = x_ref[...].astype(wq_ref.dtype)
    bias = bias_ref[...]

    q = jnp.dot(x, wq_ref[...], preferred_element_type=jnp.float32)
    out_ref[:, :dim] = (q + bias[:, :dim]).astype(out_ref.dtype)

    k = jnp.dot(x, wk_ref[...], preferred_element_type=jnp.float32)
    out_ref[:, dim:2 * dim] = (k + bias[:, dim:2 * dim]).astype(out_ref.dtype)

    v = jnp.dot(x, wv_ref[...], preferred_element_type=jnp.float32)
    out_ref[:, 2 * dim:] = (v + bias[:, 2 * dim:]).astype(out_ref.dtype)


# ----------------------------------------------------------------------------
# One-time parameter preparation (hoisted out of the per-call forward)
# ----------------------------------------------------------------------------
def prepare_lora_qkv_params(w_qkv, b_qkv, w_a_q, w_b_q, w_a_v, w_b_v,
                            compute_dtype=jnp.bfloat16, merge_lora=False):
    """PyTorch nn.Linear convention in: [out, in].  Produces pre-transposed
    [in, out] compute_dtype weights, the Q/K/V column splits, and either the
    fused LoRA-A operand [Aq|Av] + separate Bq/Bv, or (merge_lora=True,
    inference only) base weights with LoRA folded in (done in f32, cast once).
    """
    # TODO(synk): optional fp8 weight storage for the v7x MXU not implemented
    # (accuracy-budget dependent); activations stay bf16 either way.
    out_dim, dim = w_qkv.shape
    assert out_dim == 3 * dim
    r = w_a_q.shape[0]

    wqkv_t = w_qkv.T.astype(jnp.float32)                 # (dim, 3*dim), fold in f32
    wq = wqkv_t[:, :dim]
    wk = wqkv_t[:, dim:2 * dim]
    wv = wqkv_t[:, 2 * dim:]
    bias = b_qkv.reshape(1, out_dim).astype(jnp.float32)  # keep bias in f32

    if merge_lora:
        wq = wq + w_a_q.T.astype(jnp.float32) @ w_b_q.T.astype(jnp.float32)
        wv = wv + w_a_v.T.astype(jnp.float32) @ w_b_v.T.astype(jnp.float32)
        return dict(wq=wq.astype(compute_dtype), wk=wk.astype(compute_dtype),
                    wv=wv.astype(compute_dtype), bias=bias,
                    dim=dim, r=r, merged=True)

    a_qv = jnp.concatenate([w_a_q.T, w_a_v.T], axis=1).astype(compute_dtype)  # (dim, 2r)
    bq = w_b_q.T.astype(compute_dtype)                                        # (r, dim)
    bv = w_b_v.T.astype(compute_dtype)                                        # (r, dim)
    return dict(wq=wq.astype(compute_dtype), wk=wk.astype(compute_dtype),
                wv=wv.astype(compute_dtype), bias=bias,
                a_qv=a_qv, bq=bq, bv=bv, dim=dim, r=r, merged=False)


# ----------------------------------------------------------------------------
# Generation / feature queries
# ----------------------------------------------------------------------------
def _tpu_kind():
    try:
        return jax.devices()[0].device_kind.lower()
    except Exception:
        return ""


def _default_tm():
    # v5e is already strongly compute-bound at tm=256; larger tiles only add
    # VMEM pressure.  v6e/v7x benefit from halving the per-grid-step overhead
    # (keep M // tm >= 2 on v7x so the ("parallel",) grid feeds both cores).
    return 256 if "v5" in _tpu_kind() else 512


def _vmem_capacity_bytes():
    try:
        return int(pltpu.get_tpu_info().vmem_capacity_bytes)
    except Exception:
        return 64 << 20               # conservative (v7x per-TC) fallback


_SB_OK = None


def _single_buffer_supported():
    """One-time compiled feature probe for pl.Buffered(1) single-buffering of
    grid-invariant operands.  Runs eagerly (ensure_compile_time_eval) so a
    Mosaic lowering rejection is caught here even if the forward is jitted."""
    global _SB_OK
    if _SB_OK is None:
        try:
            def _k(w_ref, o_ref):
                o_ref[...] = w_ref[...] + 1.0

            with jax.ensure_compile_time_eval():
                out = pl.pallas_call(
                    _k,
                    out_shape=jax.ShapeDtypeStruct((16, 128), jnp.float32),
                    grid=(2,),
                    in_specs=[pl.BlockSpec((8, 128), lambda i: (0, 0),
                                           pipeline_mode=pl.Buffered(1))],
                    out_specs=pl.BlockSpec((8, 128), lambda i: (i, 0)),
                )(jnp.zeros((8, 128), jnp.float32))
                jax.block_until_ready(out)
            _SB_OK = True
        except Exception:
            _SB_OK = False
    return _SB_OK


# ----------------------------------------------------------------------------
# Forward
# ----------------------------------------------------------------------------
def lora_qkv_forward(x, params, *, tm=None, out_dtype=None,
                     single_buffer_weights=None):
    """x: [B, H, W, dim]; params from prepare_lora_qkv_params.
    Returns [B, H, W, 3*dim] in `out_dtype` (default: x.dtype).

    Notes:
      * out_dtype=jnp.bfloat16 is recommended on v6e when the consumer accepts
        it (pushes the kernel from writeback-bound back to MXU-bound).
      * tm defaults to 256 on v5* and 512 on v6e/v7x; weights are resident so
        only the x / out tiles grow with tm.
    """
    B, H, W, dim = x.shape
    assert dim == params["dim"]
    out_dim = 3 * dim
    M = B * H * W
    merged = params["merged"]

    out_dtype = jnp.dtype(x.dtype if out_dtype is None else out_dtype)
    if tm is None:
        tm = _default_tm()
    tm = max(8, min(_round_up(tm, 8), _round_up(M, 8)))
    grid = (pl.cdiv(M, tm),)           # ragged last block clipped by Pallas

    if single_buffer_weights is None:
        single_buffer_weights = _single_buffer_supported()

    wq, wk, wv, bias = params["wq"], params["wk"], params["wv"], params["bias"]
    cdt = wq.dtype
    cdt_isz = jnp.dtype(cdt).itemsize
    x_isz = jnp.dtype(x.dtype).itemsize
    out_isz = out_dtype.itemsize

    x2 = x.reshape(M, dim)             # view only: no cast / no pad in wrapper

    if merged:
        lora_ops = ()
        r2 = 0
    else:
        a_qv, bq, bv = params["a_qv"], params["bq"], params["bv"]
        lora_ops = (a_qv, bq, bv)
        r2 = a_qv.shape[1]

    # ---- VMEM budget (generation-aware, includes f32 intermediates) --------
    w_elems = wq.size + wk.size + wv.size + sum(w.size for w in lora_ops)
    w_bytes = w_elems * cdt_isz + bias.size * 4
    if not single_buffer_weights:
        w_bytes *= 2                                  # pipeline keeps 2nd copy
    tile_bytes = 2 * tm * dim * x_isz + 2 * tm * out_dim * out_isz
    # Compiler-managed intermediates: bf16 x copy, live per-segment f32 dot
    # result, f32 new_q/new_v, f32 + bf16 copies of h.
    interm_bytes = (tm * dim * cdt_isz + 2 * tm * dim * 4
                    + 2 * tm * max(r2, 1) * (4 + cdt_isz))
    cap = (_vmem_capacity_bytes() * 3) // 4           # headroom for spill/scratch
    vmem_limit = int(min(cap, w_bytes + tile_bytes + interm_bytes + (4 << 20)))
    vmem_limit = int(max(vmem_limit, min(cap, 32 << 20)))

    # ---- cost hint ----------------------------------------------------------
    flops = 2 * M * dim * out_dim
    if not merged:
        flops += 2 * M * dim * r2 + 2 * M * r2 * dim  # LoRA-A + both LoRA-B
    bytes_accessed = (x2.size * x_isz + w_elems * cdt_isz + bias.size * 4
                      + M * out_dim * out_isz)
    cost = pl.CostEstimate(flops=flops, transcendentals=0,
                           bytes_accessed=bytes_accessed)

    def wspec(shape):
        # Grid-invariant operand: constant index_map; single-buffered when the
        # build supports it so the pipeline doesn't hold a second weight copy.
        if single_buffer_weights:
            return pl.BlockSpec(shape, lambda i: (0, 0),
                                pipeline_mode=pl.Buffered(1))
        return pl.BlockSpec(shape, lambda i: (0, 0))

    in_specs = [pl.BlockSpec((tm, dim), lambda i: (i, 0)),   # x tile (native dtype)
                wspec((dim, dim)),                            # Wq
                wspec((dim, dim)),                            # Wk
                wspec((dim, dim)),                            # Wv
                wspec((1, out_dim))]                          # bias
    operands = [x2, wq, wk, wv, bias]
    if not merged:
        in_specs += [wspec((dim, r2)),                        # [Aq | Av]
                     wspec((params["r"], dim)),               # Bq
                     wspec((params["r"], dim))]               # Bv
        operands += [a_qv, bq, bv]

    kernel = _qkv_merged_kernel if merged else _lora_qkv_kernel

    out = pl.pallas_call(
        kernel,
        out_shape=jax.ShapeDtypeStruct((M, out_dim), out_dtype),
        grid_spec=pltpu.PrefetchScalarGridSpec(
            num_scalar_prefetch=0,
            grid=grid,
            in_specs=in_specs,
            out_specs=pl.BlockSpec((tm, out_dim), lambda i: (i, 0)),
        ),
        compiler_params=pltpu.CompilerParams(
            dimension_semantics=("parallel",),
            vmem_limit_bytes=vmem_limit,
        ),
        cost_estimate=cost,
    )(*operands)

    return out.reshape(B, H, W, out_dim)


# ----------------------------------------------------------------------------
# References
# ----------------------------------------------------------------------------
def _reference_f32(x, w_qkv, b_qkv, w_a_q, w_b_q, w_a_v, w_b_v):
    """Pure-f32 reference of the PyTorch module semantics."""
    dim = x.shape[-1]
    qkv = jnp.einsum("bhwc,oc->bhwo", x, w_qkv) + b_qkv
    new_q = jnp.einsum("bhwr,or->bhwo", jnp.einsum("bhwc,rc->bhwr", x, w_a_q), w_b_q)
    new_v = jnp.einsum("bhwr,or->bhwo", jnp.einsum("bhwc,rc->bhwr", x, w_a_v), w_b_v)
    qkv = qkv.at[..., :dim].add(new_q)
    qkv = qkv.at[..., -dim:].add(new_v)
    return qkv


def _reference_matched(x, p):
    """Same math with the kernel's bf16-operand / f32-accumulation precision."""
    B, H, W, dim = x.shape
    f32 = jnp.float32
    xm = x.reshape(-1, dim).astype(jnp.bfloat16).astype(f32)
    q = xm @ p["wq"].astype(f32)
    k = xm @ p["wk"].astype(f32)
    v = xm @ p["wv"].astype(f32)
    qkv = jnp.concatenate([q, k, v], axis=1) + p["bias"]
    if not p["merged"]:
        r = p["r"]
        h = (xm @ p["a_qv"].astype(f32)).astype(jnp.bfloat16).astype(f32)
        new_q = h[:, :r] @ p["bq"].astype(f32)
        new_v = h[:, r:] @ p["bv"].astype(f32)
        qkv = qkv.at[:, :dim].add(new_q)
        qkv = qkv.at[:, 2 * dim:].add(new_v)
    return qkv.reshape(B, H, W, 3 * dim).astype(x.dtype)


if __name__ == "__main__":
    # Small, deterministic shapes (real SAM uses dim in {768,1024,1280}, which
    # makes the per-segment stores lane-dense; dim=32 here is correct but uses
    # masked partial stores).
    B, H, W, dim, r = 2, 8, 8, 32, 4

    key = jax.random.PRNGKey(0)
    ks = jax.random.split(key, 7)
    x = jax.random.normal(ks[0], (B, H, W, dim), dtype=jnp.float32)

    # PyTorch nn.Linear convention: [out, in].
    w_qkv = jax.random.normal(ks[1], (3 * dim, dim), dtype=jnp.float32) * 0.05
    b_qkv = jax.random.normal(ks[2], (3 * dim,), dtype=jnp.float32) * 0.05
    w_a_q = jax.random.normal(ks[3], (r, dim), dtype=jnp.float32) * 0.05
    w_b_q = jax.random.normal(ks[4], (dim, r), dtype=jnp.float32) * 0.05
    w_a_v = jax.random.normal(ks[5], (r, dim), dtype=jnp.float32) * 0.05
    w_b_v = jax.random.normal(ks[6], (dim, r), dtype=jnp.float32) * 0.05

    # Training-compatible path: LoRA branches evaluated in-kernel.
    params = prepare_lora_qkv_params(w_qkv, b_qkv, w_a_q, w_b_q, w_a_v, w_b_v)
    out = jax.block_until_ready(lora_qkv_forward(x, params))
    assert out.shape == (B, H, W, 3 * dim)
    assert out.dtype == x.dtype

    ref_m = _reference_matched(x, params)
    assert jnp.allclose(out, ref_m, atol=1e-2, rtol=1e-2), "mismatch vs matched ref"

    ref_f = _reference_f32(x, w_qkv, b_qkv, w_a_q, w_b_q, w_a_v, w_b_v)
    assert jnp.allclose(out, ref_f, atol=6e-2, rtol=6e-2), "mismatch vs f32 ref"

    # Inference path: LoRA folded into the base weights (pure GEMM kernel).
    params_m = prepare_lora_qkv_params(w_qkv, b_qkv, w_a_q, w_b_q, w_a_v, w_b_v,
                                       merge_lora=True)
    out_m = jax.block_until_ready(lora_qkv_forward(x, params_m))
    assert out_m.shape == (B, H, W, 3 * dim)
    assert jnp.allclose(out_m, ref_f, atol=6e-2, rtol=6e-2), "mismatch merged vs f32 ref"

    print("KERNEL_OK")
</pallas_src>

<mosaic_0001>
module attributes {stable_mosaic.version = 11 : i64} {
  func.func @_k(%arg0: i32, %arg1: memref<8x128xf32, #tpu.memory_space<vmem>>, %arg2: memref<8x128xf32, #tpu.memory_space<vmem>>) attributes {dimension_semantics = [#tpu.dimension_semantics<arbitrary>], iteration_bounds = array<i64: 2>, scalar_prefetch = 0 : i64, scratch_operands = 0 : i64, tpu.core_type = #tpu.core_type<tc>, window_params = [{pipeline_mode = #tpu.pipeline_mode<synchronous>, transform_indices = @transform_0, window_bounds = array<i64: 8, 128>}, {transform_indices = @transform_1, window_bounds = array<i64: 8, 128>}]} {
    %c0 = arith.constant 0 : index
    %c0_0 = arith.constant 0 : index
    %0 = vector.load %arg1[%c0, %c0_0] : memref<8x128xf32, #tpu.memory_space<vmem>>, vector<8x128xf32>
    %cst = arith.constant 1.000000e+00 : f32
    %1 = vector.broadcast %cst : f32 to vector<8x128xf32>
    %2 = arith.addf %0, %1 : vector<8x128xf32>
    %c0_1 = arith.constant 0 : index
    %c0_2 = arith.constant 0 : index
    %3 = vector.load %arg2[%c0_1, %c0_2] : memref<8x128xf32, #tpu.memory_space<vmem>>, vector<8x128xf32>
    tpu.vector_store %arg2[%c0_1, %c0_2], %2 {strides = array<i32>} : memref<8x128xf32, #tpu.memory_space<vmem>>, vector<8x128xf32>,
    return
  }
  func.func @transform_0(%arg0: i32) -> (i32, i32) {
    %c0_i32 = arith.constant 0 : i32
    %c0_i32_0 = arith.constant 0 : i32
    %c0_i32_1 = arith.constant 0 : i32
    return %c0_i32, %c0_i32_0 : i32, i32
  }
  func.func @transform_1(%arg0: i32) -> (i32, i32) {
    %c0_i32 = arith.constant 0 : i32
    %c0_i32_0 = arith.constant 0 : i32
    return %arg0, %c0_i32 : i32, i32
  }
}

module attributes {stable_mosaic.version = 11 : i64} {
  func.func @_lora_qkv_kernel(%arg0: i32, %arg1: memref<128x32xf32, #tpu.memory_space<vmem>>, %arg2: memref<32x32xbf16, #tpu.memory_space<vmem>>, %arg3: memref<32x32xbf16, #tpu.memory_space<vmem>>, %arg4: memref<32x32xbf16, #tpu.memory_space<vmem>>, %arg5: memref<1x96xf32, #tpu.memory_space<vmem>>, %arg6: memref<32x8xbf16, #tpu.memory_space<vmem>>, %arg7: memref<4x32xbf16, #tpu.memory_space<vmem>>, %arg8: memref<4x32xbf16, #tpu.memory_space<vmem>>, %arg9: memref<128x96xf32, #tpu.memory_space<vmem>>) attributes {dimension_semantics = [#tpu.dimension_semantics<parallel>], iteration_bounds = array<i64: 1>, scalar_prefetch = 0 : i64, scratch_operands = 0 : i64, tpu.core_type = #tpu.core_type<tc>, window_params = [{transform_indices = @transform_0, window_bounds = array<i64: 128, 32>}, {pipeline_mode = #tpu.pipeline_mode<synchronous>, transform_indices = @transform_1, window_bounds = array<i64: 32, 32>}, {pipeline_mode = #tpu.pipeline_mode<synchronous>, transform_indices = @transform_2, window_bounds = array<i64: 32, 32>}, {pipeline_mode = #tpu.pipeline_mode<synchronous>, transform_indices = @transform_3, window_bounds = array<i64: 32, 32>}, {pipeline_mode = #tpu.pipeline_mode<synchronous>, transform_indices = @transform_4, window_bounds = array<i64: 1, 96>}, {pipeline_mode = #tpu.pipeline_mode<synchronous>, transform_indices = @transform_5, window_bounds = array<i64: 32, 8>}, {pipeline_mode = #tpu.pipeline_mode<synchronous>, transform_indices = @transform_6, window_bounds = array<i64: 4, 32>}, {pipeline_mode = #tpu.pipeline_mode<synchronous>, transform_indices = @transform_7, window_bounds = array<i64: 4, 32>}, {transform_indices = @transform_8, window_bounds = array<i64: 128, 96>}]} {
    %c0 = arith.constant 0 : index
    %c0_0 = arith.constant 0 : index
    %0 = vector.load %arg1[%c0, %c0_0] : memref<128x32xf32, #tpu.memory_space<vmem>>, vector<128x32xf32>
    %1 = arith.truncf %0 : vector<128x32xf32> to vector<128x32xbf16>
    %c0_1 = arith.constant 0 : index
    %c0_2 = arith.constant 0 : index
    %2 = vector.load %arg5[%c0_1, %c0_2] : memref<1x96xf32, #tpu.memory_space<vmem>>, vector<1x96xf32>
    %c0_3 = arith.constant 0 : index
    %c0_4 = arith.constant 0 : index
    %3 = vector.load %arg6[%c0_3, %c0_4] : memref<32x8xbf16, #tpu.memory_space<vmem>>, vector<32x8xbf16>
    %cst = arith.constant dense<0.000000e+00> : vector<128x8xf32>
    %4 = tpu.matmul %1, %3, %cst {dimension_numbers = #tpu.dot_dimension_numbers<[1], [0], [0], [1], [0, 0, 1, 1], [], []>} : vector<128x32xbf16>, vector<32x8xbf16>, vector<128x8xf32> -> vector<128x8xf32>
    %5 = arith.truncf %4 : vector<128x8xf32> to vector<128x8xbf16>
    %c0_5 = arith.constant 0 : index
    %c0_6 = arith.constant 0 : index
    %6 = vector.load %arg2[%c0_5, %c0_6] : memref<32x32xbf16, #tpu.memory_space<vmem>>, vector<32x32xbf16>
    %cst_7 = arith.constant dense<0.000000e+00> : vector<128x32xf32>
    %7 = tpu.matmul %1, %6, %cst_7 {dimension_numbers = #tpu.dot_dimension_numbers<[1], [0], [0], [1], [0, 0, 1, 1], [], []>} : vector<128x32xbf16>, vector<32x32xbf16>, vector<128x32xf32> -> vector<128x32xf32>
    %8 = vector.extract_strided_slice %5 {offsets = [0, 0], sizes = [128, 4], strides = [1, 1]} : vector<128x8xbf16> to vector<128x4xbf16>
    %c0_8 = arith.constant 0 : index
    %c0_9 = arith.constant 0 : index
    %9 = vector.load %arg7[%c0_8, %c0_9] : memref<4x32xbf16, #tpu.memory_space<vmem>>, vector<4x32xbf16>
    %cst_10 = arith.constant dense<0.000000e+00> : vector<128x32xf32>
    %10 = tpu.matmul %8, %9, %cst_10 {dimension_numbers = #tpu.dot_dimension_numbers<[1], [0], [0], [1], [0, 0, 1, 1], [], []>} : vector<128x4xbf16>, vector<4x32xbf16>, vector<128x32xf32> -> vector<128x32xf32>
    %11 = vector.extract_strided_slice %2 {offsets = [0, 0], sizes = [1, 32], strides = [1, 1]} : vector<1x96xf32> to vector<1x32xf32>
    %12 = vector.broadcast %11 : vector<1x32xf32> to vector<128x32xf32>
    %13 = arith.addf %7, %12 : vector<128x32xf32>
    %14 = arith.addf %13, %10 : vector<128x32xf32>
    %c0_11 = arith.constant 0 : index
    %c0_12 = arith.constant 0 : index
    %15 = vector.load %arg9[%c0_11, %c0_12] : memref<128x96xf32, #tpu.memory_space<vmem>>, vector<128x32xf32>
    tpu.vector_store %arg9[%c0_11, %c0_12], %14 {strides = array<i32>} : memref<128x96xf32, #tpu.memory_space<vmem>>, vector<128x32xf32>,
    %c0_13 = arith.constant 0 : index
    %c0_14 = arith.constant 0 : index
    %16 = vector.load %arg3[%c0_13, %c0_14] : memref<32x32xbf16, #tpu.memory_space<vmem>>, vector<32x32xbf16>
    %cst_15 = arith.constant dense<0.000000e+00> : vector<128x32xf32>
    %17 = tpu.matmul %1, %16, %cst_15 {dimension_numbers = #tpu.dot_dimension_numbers<[1], [0], [0], [1], [0, 0, 1, 1], [], []>} : vector<128x32xbf16>, vector<32x32xbf16>, vector<128x32xf32> -> vector<128x32xf32>
    %18 = vector.extract_strided_slice %2 {offsets = [0, 32], sizes = [1, 32], strides = [1, 1]} : vector<1x96xf32> to vector<1x32xf32>
    %19 = vector.broadcast %18 : vector<1x32xf32> to vector<128x32xf32>
    %20 = arith.addf %17, %19 : vector<128x32xf32>
    %c0_16 = arith.constant 0 : index
    %c32 = arith.constant 32 : index
    %21 = vector.load %arg9[%c0_16, %c32] : memref<128x96xf32, #tpu.memory_space<vmem>>, vector<128x32xf32>
    tpu.vector_store %arg9[%c0_16, %c32], %20 {strides = array<i32>} : memref<128x96xf32, #tpu.memory_space<vmem>>, vector<128x32xf32>,
    %c0_17 = arith.constant 0 : index
    %c0_18 = arith.constant 0 : index
    %22 = vector.load %arg4[%c0_17, %c0_18] : memref<32x32xbf16, #tpu.memory_space<vmem>>, vector<32x32xbf16>
    %cst_19 = arith.constant dense<0.000000e+00> : vector<128x32xf32>
    %23 = tpu.matmul %1, %22, %cst_19 {dimension_numbers = #tpu.dot_dimension_numbers<[1], [0], [0], [1], [0, 0, 1, 1], [], []>} : vector<128x32xbf16>, vector<32x32xbf16>, vector<128x32xf32> -> vector<128x32xf32>
    %24 = vector.extract_strided_slice %5 {offsets = [0, 4], sizes = [128, 4], strides = [1, 1]} : vector<128x8xbf16> to vector<128x4xbf16>
    %c0_20 = arith.constant 0 : index
    %c0_21 = arith.constant 0 : index
    %25 = vector.load %arg8[%c0_20, %c0_21] : memref<4x32xbf16, #tpu.memory_space<vmem>>, vector<4x32xbf16>
    %cst_22 = arith.constant dense<0.000000e+00> : vector<128x32xf32>
    %26 = tpu.matmul %24, %25, %cst_22 {dimension_numbers = #tpu.dot_dimension_numbers<[1], [0], [0], [1], [0, 0, 1, 1], [], []>} : vector<128x4xbf16>, vector<4x32xbf16>, vector<128x32xf32> -> vector<128x32xf32>
    %27 = vector.extract_strided_slice %2 {offsets = [0, 64], sizes = [1, 32], strides = [1, 1]} : vector<1x96xf32> to vector<1x32xf32>
    %28 = vector.broadcast %27 : vector<1x32xf32> to vector<128x32xf32>
    %29 = arith.addf %23, %28 : vector<128x32xf32>
    %30 = arith.addf %29, %26 : vector<128x32xf32>
    %c0_23 = arith.constant 0 : index
    %c64 = arith.constant 64 : index
    %31 = vector.load %arg9[%c0_23, %c64] : memref<128x96xf32, #tpu.memory_space<vmem>>, vector<128x32xf32>
    tpu.vector_store %arg9[%c0_23, %c64], %30 {strides = array<i32>} : memref<128x96xf32, #tpu.memory_space<vmem>>, vector<128x32xf32>,
    return
  }
  func.func @transform_0(%arg0: i32) -> (i32, i32) {
    %c0_i32 = arith.constant 0 : i32
    %c0_i32_0 = arith.constant 0 : i32
    return %arg0, %c0_i32 : i32, i32
  }
  func.func @transform_1(%arg0: i32) -> (i32, i32) {
    %c0_i32 = arith.constant 0 : i32
    %c0_i32_0 = arith.constant 0 : i32
    %c0_i32_1 = arith.constant 0 : i32
    return %c0_i32, %c0_i32_0 : i32, i32
  }
  func.func @transform_2(%arg0: i32) -> (i32, i32) {
    %c0_i32 = arith.constant 0 : i32
    %c0_i32_0 = arith.constant 0 : i32
    %c0_i32_1 = arith.constant 0 : i32
    return %c0_i32, %c0_i32_0 : i32, i32
  }
  func.func @transform_3(%arg0: i32) -> (i32, i32) {
    %c0_i32 = arith.constant 0 : i32
    %c0_i32_0 = arith.constant 0 : i32
    %c0_i32_1 = arith.constant 0 : i32
    return %c0_i32, %c0_i32_0 : i32, i32
  }
  func.func @transform_4(%arg0: i32) -> (i32, i32) {
    %c0_i32 = arith.constant 0 : i32
    %c0_i32_0 = arith.constant 0 : i32
    %c0_i32_1 = arith.constant 0 : i32
    return %c0_i32, %c0_i32_0 : i32, i32
  }
  func.func @transform_5(%arg0: i32) -> (i32, i32) {
    %c0_i32 = arith.constant 0 : i32
    %c0_i32_0 = arith.constant 0 : i32
    %c0_i32_1 = arith.constant 0 : i32
    return %c0_i32, %c0_i32_0 : i32, i32
  }
  func.func @transform_6(%arg0: i32) -> (i32, i32) {
    %c0_i32 = arith.constant 0 : i32
    %c0_i32_0 = arith.constant 0 : i32
    %c0_i32_1 = arith.constant 0 : i32
    return %c0_i32, %c0_i32_0 : i32, i32
  }
  func.func @transform_7(%arg0: i32) -> (i32, i32) {
    %c0_i32 = arith.constant 0 : i32
    %c0_i32_0 = arith.constant 0 : i32
    %c0_i32_1 = arith.constant 0 : i32
    return %c0_i32, %c0_i32_0 : i32, i32
  }
  func.func @transform_8(%arg0: i32) -> (i32, i32) {
    %c0_i32 = arith.constant 0 : i32
    %c0_i32_0 = arith.constant 0 : i32
    return %arg0, %c0_i32 : i32, i32
  }
}

</mosaic_0001>

<llo_original>
// kernel: tpu_custom_call.1
$region0: #{tpu_custom_call.1}
  #allocation0 [shape = 'u32[]', space=smem, size = 0x4, offset = 0x4, fixed_abs, tag = 'smem constant byte address 0x4 - core index']
  #allocation1 [shape = 'u32[72,128]{1,0:T(1,128)}', space=vmem, size = 0x9000, scoped, tag = 'internal scratch']
  %s0 = inlined_call_operand.hbm [shape: f32[8,128], index: 0, kind: input, shape index: {}]
  %s1 = inlined_call_operand.hbm [shape: f32[16,128], index: 1, kind: output, shape index: {}]
  %s2 = sld [smem:[#allocation0]]
  $region41: #{tpu_custom_call.1} parent=0
    _
  %s4 = ssub.s32 1, %s2
  %s5 = scalar_select 0, %s4, %s2
  $region1: #{tpu_custom_call.1} parent=0
    #allocation2 [shape = 'u8[4096]{0}', space=vmem, size = 0x1000, scoped, tag = 'input window, operand 0, single buffered']
    #allocation3 [shape = 's32[2]{0}', space=sflag, size = 0x8, scoped, tag = 'scoped memory for tpu_custom_call.1']
    #allocation4 [shape = 's32[2]{0}', space=sflag, size = 0x8, scoped, tag = 'scoped memory for tpu_custom_call.1']
    #allocation5 [shape = 'u8[8192]{0}', space=vmem, size = 0x2000, scoped, tag = 'output window, operand 0']
    %6 = vsyncpa [#allocation3], 0
    %7 = vsyncpa [#allocation4], 0
    %s8 = scalar_lea.sflag [#allocation4], 1
    %9 = vsyncpa %s8, 0
    loop: start=0, step=1, limit=4
    $region2: #{tpu_custom_call.1} parent=1 // loop_pre_header
      _
    $region3: #{tpu_custom_call.1} parent=1 // loop_header
      %s11 = sphi 0, %s15
      %p12 = scmp.ge.s32.totalorder %s11, 4
      %s19 = sphi 0, %s19
      %s21 = sphi 0, %s19
      %s22 = sphi 0, %s21
      %s36 = sphi 0, %s22
      %s42 = sphi 0, %s44
      %s45 = sphi 0, %s42
      %s46 = sphi 0, %s45
      %s62 = sphi 0, %s46
    $region4: #{tpu_custom_call.1} parent=1 // loop_header_branch
      %14 = sbr.rel (%p12) target = $region8
    $region5: #{tpu_custom_call.1} parent=1 // loop_body
      %s16 = ssub.s32 %s11, 1
      %s17 = ssub.s32 %s11, 2
      %s18 = sadd.s32 %s11, 1
      %s20 = sadd.s32 %s19, 1
      %p23 = scmp.eq.s32.totalorder %s11, 1
      %p24 = scmp.ne.s32.totalorder %s19, %s21
      %p25 = scmp.eq.s32.totalorder %s11, 0
      %p26 = por %p24, %p25
      %p27 = scmp.ne.s32.totalorder %s19, %s21
      %p28 = scmp.eq.s32.totalorder %s16, 1
      %p29 = por %p27, %p28
      %p30 = scmp.ne.s32.totalorder %s21, %s22
      %p31 = scmp.eq.s32.totalorder %s16, 0
      %p32 = por %p30, %p31
      %p33 = scmp.ne.s32.totalorder %s21, %s22
      %p34 = scmp.eq.s32.totalorder %s17, 1
      %p35 = por %p33, %p34
      %p37 = scmp.ne.s32.totalorder %s22, %s36
      %p38 = scmp.eq.s32.totalorder %s17, 0
      %p39 = por %p37, %p38
      %s40 = ssub.s32 %s11, %s18
      %p41 = scmp.eq.s32.totalorder %s40, 0
      %s43 = sadd.s32 %s42, 1
      %s44 = scalar_select %p41, %s42, %s43
      %p47 = pneg %p41
      %p48 = scmp.eq.s32.totalorder %s11, 1
      %p49 = por %p47, %p48
      %p50 = scmp.ne.s32.totalorder %s42, %s45
      %p51 = scmp.eq.s32.totalorder %s11, 0
      %p52 = por %p50, %p51
      %p53 = scmp.ne.s32.totalorder %s42, %s45
      %p54 = scmp.eq.s32.totalorder %s16, 1
      %p55 = por %p53, %p54
      %p56 = scmp.ne.s32.totalorder %s45, %s46
      %p57 = scmp.eq.s32.totalorder %s16, 0
      %p58 = por %p56, %p57
      %p59 = scmp.ne.s32.totalorder %s45, %s46
      %p60 = scmp.eq.s32.totalorder %s17, 1
      %p61 = por %p59, %p60
      %p63 = scmp.ne.s32.totalorder %s46, %s62
      %p64 = scmp.eq.s32.totalorder %s17, 0
      %p65 = por %p63, %p64
      %p66 = scmp.le.s32.totalorder 1, %s11
      %p67 = scmp.lt.s32.totalorder %s11, 3
      %p68 = pnand %p66, %p67
      %p69 = pneg %p68
      // Predicated region
      $region9: #{tpu_custom_call.1} parent=5 // pred_check
        _
      $region10: #{tpu_custom_call.1} parent=5 // pred_check_branch
        %71 = sbr.rel (%p68) target = $region12
      $region11: #{tpu_custom_call.1} parent=5 // pred_region
        %s72 = ssub.s32 %s11, 1
        // Predicated region
        $region13: #{tpu_custom_call.1} parent=11 // pred_check
          %p73 = pneg %p32
        $region14: #{tpu_custom_call.1} parent=11 // pred_check_branch
          %75 = sbr.rel (%p73) target = $region16
        $region15: #{tpu_custom_call.1} parent=11 // pred_region
          %77 = vsyncadd [#allocation3], 0
          %s79 = sshll.u32 %s0, 4
          %s80 = int_to_ptr.hbm [resolvable:$true] %s79
          %s81 = sshll.u32 [#allocation2], 4
          %s82 = int_to_ptr.vmem [resolvable:$true] %s81
          %84 = dma.hbm_to_vmem [thread:$0]  %s80, 128, %s82, [#allocation3]
        $region16: #{tpu_custom_call.1} parent=11 // pred_fallthru
          _
      $region12: #{tpu_custom_call.1} parent=5 // pred_fallthru
        _
      %p85 = scmp.lt.s32.totalorder %s11, 2
      // Predicated region
      $region17: #{tpu_custom_call.1} parent=5 // pred_check
        %p86 = pneg %p85
      $region18: #{tpu_custom_call.1} parent=5 // pred_check_branch
        %88 = sbr.rel (%p86) target = $region20
      $region19: #{tpu_custom_call.1} parent=5 // pred_region
        _
      $region20: #{tpu_custom_call.1} parent=5 // pred_fallthru
        _
      %p89 = scmp.le.s32.totalorder 1, %s11
      %p90 = scmp.lt.s32.totalorder %s11, 3
      %p91 = pnand %p89, %p90
      %p92 = pneg %p91
      // Predicated region
      $region21: #{tpu_custom_call.1} parent=5 // pred_check
        _
      $region22: #{tpu_custom_call.1} parent=5 // pred_check_branch
        %94 = sbr.rel (%p91) target = $region24
      $region23: #{tpu_custom_call.1} parent=5 // pred_region
        %s95 = ssub.s32 %s11, 1
        // Predicated region
        $region25: #{tpu_custom_call.1} parent=23 // pred_check
          %p96 = pneg %p32
        $region26: #{tpu_custom_call.1} parent=23 // pred_check_branch
          %98 = sbr.rel (%p96) target = $region28
        $region27: #{tpu_custom_call.1} parent=23 // pred_region
          %100 = dma.done [#allocation3], 128
        $region28: #{tpu_custom_call.1} parent=23 // pred_fallthru
          _
        %p101 = pneg %p32
        %p102 = pneg %p29
        %p103 = pneg %p58
        %p104 = pneg %p55
        %s105 = sand.u32 %s45, 1
        %s106 = scalar_lea.sflag [#allocation4], %s105
        %s107 = sand.u32 %s45, 1
        %s108 = smul.addr %s107, 8
        %s109 = scalar_lea.vmem [#allocation5], %s108
        %v110 = vld [vmem:[#allocation2] sm:$0xff]
        %v111 = vadd.f32 %v110, 1.0
        %112 = vst [vmem:[%s109] sm:$0xff] %v111
        %s113 = sand.u32 %s45, 1
        %s114 = scalar_lea.sflag [#allocation4], %s113
        %s115 = sand.u32 %s45, 1
        %s116 = smul.addr %s115, 8
        %s117 = scalar_lea.vmem [#allocation5], %s116
        // Predicated region
        $region29: #{tpu_custom_call.1} parent=23 // pred_check
          %p118 = pneg %p55
        $region30: #{tpu_custom_call.1} parent=23 // pred_check_branch
          %120 = sbr.rel (%p118) target = $region32
        $region31: #{tpu_custom_call.1} parent=23 // pred_region
          %122 = vsyncadd %s114, 0
          %s123 = smul.addr %s16, 8
          %s124 = scalar_lea.hbm %s1, %s123
          %s126 = sshll.u32 %s117, 4
          %s127 = int_to_ptr.vmem [resolvable:$true] %s126
          %s128 = sshll.u32 %s124, 4
          %s129 = int_to_ptr.hbm [resolvable:$true] %s128
          %131 = dma.vmem_to_hbm [thread:$0]  %s127, 128, %s129, %s114
        $region32: #{tpu_custom_call.1} parent=23 // pred_fallthru
          _
      $region24: #{tpu_custom_call.1} parent=5 // pred_fallthru
        _
      %p132 = scmp.le.s32.totalorder 2, %s11
      // Predicated region
      $region33: #{tpu_custom_call.1} parent=5 // pred_check
        %p133 = pneg %p132
      $region34: #{tpu_custom_call.1} parent=5 // pred_check_branch
        %135 = sbr.rel (%p133) target = $region36
      $region35: #{tpu_custom_call.1} parent=5 // pred_region
        %s136 = ssub.s32 %s11, 2
        // Predicated region
        $region37: #{tpu_custom_call.1} parent=35 // pred_check
          %p137 = pneg %p61
        $region38: #{tpu_custom_call.1} parent=35 // pred_check_branch
          %139 = sbr.rel (%p137) target = $region40
        $region39: #{tpu_custom_call.1} parent=35 // pred_region
          %s140 = sand.u32 %s46, 1
          %s141 = scalar_lea.sflag [#allocation4], %s140
          %s142 = sand.u32 %s46, 1
          %s143 = smul.addr %s142, 8
          %s144 = scalar_lea.vmem [#allocation5], %s143
          %146 = dma.done %s141, 128
        $region40: #{tpu_custom_call.1} parent=35 // pred_fallthru
          _
      $region36: #{tpu_custom_call.1} parent=5 // pred_fallthru
        _
    $region6: #{tpu_custom_call.1} parent=1 // loop_footer
      %s15 = sadd.s32 1, %s11
    $region7: #{tpu_custom_call.1} parent=1 // loop_footer_branch
      %10 = sbr.rel target = $region3
    $region8: #{tpu_custom_call.1} parent=1 // loop_exit
      _
    %147 = vsyncpa [#allocation3], 1
    %s148 = scalar_lea.sflag [#allocation3], 1
    %149 = vsyncpa %s148, 1
    %150 = vsyncpa [#allocation4], 1
    %s151 = scalar_lea.sflag [#allocation4], 1
    %152 = vsyncpa %s151, 1

// kernel: tpu_custom_call.1
$region0: #{tpu_custom_call.1}
  #allocation0 [shape = 'u32[]', space=smem, size = 0x4, offset = 0x4, fixed_abs, tag = 'smem constant byte address 0x4 - core index']
  #allocation1 [shape = 'u32[72,128]{1,0:T(1,128)}', space=vmem, size = 0x9000, scoped, tag = 'internal scratch']
  %s0 = inlined_call_operand.vmem [shape: f32[128,32], index: 0, kind: input, shape index: {}]
  %s1 = inlined_call_operand.vmem [shape: bf16[32,32], index: 1, kind: input, shape index: {}]
  %s2 = inlined_call_operand.vmem [shape: bf16[32,32], index: 2, kind: input, shape index: {}]
  %s3 = inlined_call_operand.vmem [shape: bf16[32,32], index: 3, kind: input, shape index: {}]
  %s4 = inlined_call_operand.vmem [shape: f32[1,96], index: 4, kind: input, shape index: {}]
  %s5 = inlined_call_operand.vmem [shape: bf16[32,8], index: 5, kind: input, shape index: {}]
  %s6 = inlined_call_operand.vmem [shape: bf16[4,32], index: 6, kind: input, shape index: {}]
  %s7 = inlined_call_operand.vmem [shape: bf16[4,32], index: 7, kind: input, shape index: {}]
  %s8 = inlined_call_operand.vmem [shape: f32[128,96], index: 8, kind: output, shape index: {}]
  %s9 = sld [smem:[#allocation0]]
  $region42: #{tpu_custom_call.1} parent=0
    _
  %s11 = ssub.s32 1, %s9
  %s12 = scalar_select 0, %s11, %s9
  // Predicated region
  $region2: #{tpu_custom_call.1} parent=0 // pred_check
    _
  $region3: #{tpu_custom_call.1} parent=0 // pred_check_branch
    %14 = sbr.rel (0) target = $region5
  $region4: #{tpu_custom_call.1} parent=0 // pred_region
    _
  $region5: #{tpu_custom_call.1} parent=0 // pred_fallthru
    _
  // Predicated region
  $region6: #{tpu_custom_call.1} parent=0 // pred_check
    _
  $region7: #{tpu_custom_call.1} parent=0 // pred_check_branch
    %16 = sbr.rel (0) target = $region9
  $region8: #{tpu_custom_call.1} parent=0 // pred_region
    _
  $region9: #{tpu_custom_call.1} parent=0 // pred_fallthru
    _
  // Predicated region
  $region10: #{tpu_custom_call.1} parent=0 // pred_check
    _
  $region11: #{tpu_custom_call.1} parent=0 // pred_check_branch
    %18 = sbr.rel (0) target = $region13
  $region12: #{tpu_custom_call.1} parent=0 // pred_region
    _
  $region13: #{tpu_custom_call.1} parent=0 // pred_fallthru
    _
  // Predicated region
  $region14: #{tpu_custom_call.1} parent=0 // pred_check
    _
  $region15: #{tpu_custom_call.1} parent=0 // pred_check_branch
    %20 = sbr.rel (0) target = $region17
  $region16: #{tpu_custom_call.1} parent=0 // pred_region
    _
  $region17: #{tpu_custom_call.1} parent=0 // pred_fallthru
    _
  // Predicated region
  $region18: #{tpu_custom_call.1} parent=0 // pred_check
    _
  $region19: #{tpu_custom_call.1} parent=0 // pred_check_branch
    %22 = sbr.rel (0) target = $region21
  $region20: #{tpu_custom_call.1} parent=0 // pred_region
    _
  $region21: #{tpu_custom_call.1} parent=0 // pred_fallthru
    _
  // Predicated region
  $region22: #{tpu_custom_call.1} parent=0 // pred_check
    _
  $region23: #{tpu_custom_call.1} parent=0 // pred_check_branch
    %24 = sbr.rel (0) target = $region25
  $region24: #{tpu_custom_call.1} parent=0 // pred_region
    _
  $region25: #{tpu_custom_call.1} parent=0 // pred_fallthru
    _
  // Predicated region
  $region26: #{tpu_custom_call.1} parent=0 // pred_check
    _
  $region27: #{tpu_custom_call.1} parent=0 // pred_check_branch
    %26 = sbr.rel (0) target = $region29
  $region28: #{tpu_custom_call.1} parent=0 // pred_region
    _
  $region29: #{tpu_custom_call.1} parent=0 // pred_fallthru
    _
  // Predicated region
  $region30: #{tpu_custom_call.1} parent=0 // pred_check
    _
  $region31: #{tpu_custom_call.1} parent=0 // pred_check_branch
    %28 = sbr.rel (0) target = $region33
  $region32: #{tpu_custom_call.1} parent=0 // pred_region
    _
  $region33: #{tpu_custom_call.1} parent=0 // pred_fallthru
    _
  %v30 = vld [vmem:[%s0] sm:$0xff]
  %v31 = vld [vmem:[%s0 + $0x8] sm:$0xff]
  %v32 = vld [vmem:[%s0 + $0x10] sm:$0xff]
  %v33 = vld [vmem:[%s0 + $0x18] sm:$0xff]
  %v34 = vld [vmem:[%s0 + $0x20] sm:$0xff]
  %v35 = vld [vmem:[%s0 + $0x28] sm:$0xff]
  %v36 = vld [vmem:[%s0 + $0x30] sm:$0xff]
  %v37 = vld [vmem:[%s0 + $0x38] sm:$0xff]
  %v38 = vld [vmem:[%s0 + $0x40] sm:$0xff]
  %v39 = vld [vmem:[%s0 + $0x48] sm:$0xff]
  %v40 = vld [vmem:[%s0 + $0x50] sm:$0xff]
  %v41 = vld [vmem:[%s0 + $0x58] sm:$0xff]
  %v42 = vld [vmem:[%s0 + $0x60] sm:$0xff]
  %v43 = vld [vmem:[%s0 + $0x68] sm:$0xff]
  %v44 = vld [vmem:[%s0 + $0x70] sm:$0xff]
  %v45 = vld [vmem:[%s0 + $0x78] sm:$0xff]
  %v46 = vpack.c.bf16 %v31, %v30
  %v47 = vpack.c.bf16 %v33, %v32
  %v48 = vpack.c.bf16 %v35, %v34
  %v49 = vpack.c.bf16 %v37, %v36
  %v50 = vpack.c.bf16 %v39, %v38
  %v51 = vpack.c.bf16 %v41, %v40
  %v52 = vpack.c.bf16 %v43, %v42
  %v53 = vpack.c.bf16 %v45, %v44
  %v54 = vld [vmem:[%s4] sm:$0x1]
  %v55 = vld [vmem:[%s5] sm:$0xf]
  %v56 = vld [vmem:[%s5 + $0x4] sm:$0xf]
  %v57 = vld [vmem:[%s5 + $0x8] sm:$0xf]
  %v58 = vld [vmem:[%s5 + $0xc] sm:$0xf]
  %v63 = vunpack.c.l.b16 %v55
  %v64 = vunpack.c.l.b16 %v56
  %v65 = vunpack.c.l.b16 %v57
  %v66 = vunpack.c.l.b16 %v58
  %v67 = vpack.c.b16 %v64, %v63
  %v68 = vpack.c.b16 %v66, %v65
  %vm71 = vcmask 261120
  %v73 = vsel %vm71, %v46, 0
  %v76 = vsel %vm71, %v47, 0
  %v79 = vsel %vm71, %v48, 0
  %v82 = vsel %vm71, %v49, 0
  %v85 = vsel %vm71, %v50, 0
  %v88 = vsel %vm71, %v51, 0
  %v91 = vsel %vm71, %v52, 0
  %v94 = vsel %vm71, %v53, 0
  %96 = vmatpush.bf16.msra.mxu0 0
  %97 = vmatpush.bf16.msra.mxu0 0
  %98 = vmatpush.bf16.msra.mxu0 0
  %99 = vmatpush.bf16.msra.mxu0 0
  %100 = vmatpush.bf16.msra.mxu0 0
  %101 = vmatpush.bf16.msra.mxu0 0
  %102 = vmatpush.bf16.msra.mxu0 %v68
  %103 = vmatpush.bf16.msra.mxu0 %v67
  %104 = vmatmul.bf16.gmra.mxu0 %v73
  %v105 = vpop.f32.mrf.mxu0
  %v106 = vadd.f32 0.0, %v105
  %v107 = vpop.f32.mrf.mxu0
  %v108 = vadd.f32 0.0, %v107
  %109 = vmatmul.bf16.gmra.mxu0 %v76
  %v110 = vpop.f32.mrf.mxu0
  %v111 = vadd.f32 0.0, %v110
  %v112 = vpop.f32.mrf.mxu0
  %v113 = vadd.f32 0.0, %v112
  %114 = vmatmul.bf16.gmra.mxu0 %v79
  %v115 = vpop.f32.mrf.mxu0
  %v116 = vadd.f32 0.0, %v115
  %v117 = vpop.f32.mrf.mxu0
  %v118 = vadd.f32 0.0, %v117
  %119 = vmatmul.bf16.gmra.mxu0 %v82
  %v120 = vpop.f32.mrf.mxu0
  %v121 = vadd.f32 0.0, %v120
  %v122 = vpop.f32.mrf.mxu0
  %v123 = vadd.f32 0.0, %v122
  %124 = vmatmul.bf16.gmra.mxu0 %v85
  %v125 = vpop.f32.mrf.mxu0
  %v126 = vadd.f32 0.0, %v125
  %v127 = vpop.f32.mrf.mxu0
  %v128 = vadd.f32 0.0, %v127
  %129 = vmatmul.bf16.gmra.mxu0 %v88
  %v130 = vpop.f32.mrf.mxu0
  %v131 = vadd.f32 0.0, %v130
  %v132 = vpop.f32.mrf.mxu0
  %v133 = vadd.f32 0.0, %v132
  %134 = vmatmul.bf16.gmra.mxu0 %v91
  %v135 = vpop.f32.mrf.mxu0
  %v136 = vadd.f32 0.0, %v135
  %v137 = vpop.f32.mrf.mxu0
  %v138 = vadd.f32 0.0, %v137
  %139 = vmatmul.bf16.gmra.mxu0 %v94
  %v140 = vpop.f32.mrf.mxu0
  %v141 = vadd.f32 0.0, %v140
  %v142 = vpop.f32.mrf.mxu0
  %v143 = vadd.f32 0.0, %v142
  %144 = vdwg.mxu0
  %v145 = vpack.c.bf16 %v106, %v106
  %v146 = vpack.c.bf16 %v108, %v108
  %v147 = vpack.c.bf16 %v111, %v111
  %v148 = vpack.c.bf16 %v113, %v113
  %v149 = vpack.c.bf16 %v116, %v116
  %v150 = vpack.c.bf16 %v118, %v118
  %v151 = vpack.c.bf16 %v121, %v121
  %v152 = vpack.c.bf16 %v123, %v123
  %v153 = vpack.c.bf16 %v126, %v126
  %v154 = vpack.c.bf16 %v128, %v128
  %v155 = vpack.c.bf16 %v131, %v131
  %v156 = vpack.c.bf16 %v133, %v133
  %v157 = vpack.c.bf16 %v136, %v136
  %v158 = vpack.c.bf16 %v138, %v138
  %v159 = vpack.c.bf16 %v141, %v141
  %v160 = vpack.c.bf16 %v143, %v143
  %v161 = vld [vmem:[%s1] sm:$0xf]
  %v162 = vld [vmem:[%s1 + $0x4] sm:$0xf]
  %v163 = vld [vmem:[%s1 + $0x8] sm:$0xf]
  %v164 = vld [vmem:[%s1 + $0xc] sm:$0xf]
  %v165 = vld [vmem:[%s6] sm:$0x3]
  %v182 = vunpack.c.l.b16 %v145
  %v183 = vunpack.c.l.b16 %v146
  %v184 = vunpack.c.l.b16 %v147
  %v185 = vunpack.c.l.b16 %v148
  %v186 = vunpack.c.l.b16 %v149
  %v187 = vunpack.c.l.b16 %v150
  %v188 = vunpack.c.l.b16 %v151
  %v189 = vunpack.c.l.b16 %v152
  %v190 = vunpack.c.l.b16 %v153
  %v191 = vunpack.c.l.b16 %v154
  %v192 = vunpack.c.l.b16 %v155
  %v193 = vunpack.c.l.b16 %v156
  %v194 = vunpack.c.l.b16 %v157
  %v195 = vunpack.c.l.b16 %v158
  %v196 = vunpack.c.l.b16 %v159
  %v197 = vunpack.c.l.b16 %v160
  %v198 = vpack.c.b16 %v183, %v182
  %v199 = vpack.c.b16 %v185, %v184
  %v200 = vpack.c.b16 %v187, %v186
  %v201 = vpack.c.b16 %v189, %v188
  %v202 = vpack.c.b16 %v191, %v190
  %v203 = vpack.c.b16 %v193, %v192
  %v204 = vpack.c.b16 %v195, %v194
  %v205 = vpack.c.b16 %v197, %v196
  %vm206 = vcmask 31744
  %v208 = vsel %vm206, %v198, 0
  %v211 = vsel %vm206, %v199, 0
  %v214 = vsel %vm206, %v200, 0
  %v217 = vsel %vm206, %v201, 0
  %v220 = vsel %vm206, %v202, 0
  %v223 = vsel %vm206, %v203, 0
  %v226 = vsel %vm206, %v204, 0
  %v229 = vsel %vm206, %v205, 0
  %vm231 = vcmask 1041408
  %v233 = vsel %vm231, %v165, 0
  %235 = vmatpush.bf16.msra.mxu0 0
  %236 = vmatpush.bf16.msra.mxu0 0
  %237 = vmatpush.bf16.msra.mxu0 0
  %238 = vmatpush.bf16.msra.mxu0 0
  %239 = vmatpush.bf16.msra.mxu0 0
  %240 = vmatpush.bf16.msra.mxu0 0
  %241 = vmatpush.bf16.msra.mxu0 0
  %242 = vmatpush.bf16.msra.mxu0 %v233
  %243 = vmatmul.bf16.gmra.mxu0 %v208
  %v244 = vpop.f32.mrf.mxu0
  %v245 = vadd.f32 0.0, %v244
  %v246 = vpop.f32.mrf.mxu0
  %v247 = vadd.f32 0.0, %v246
  %248 = vmatmul.bf16.gmra.mxu0 %v211
  %v249 = vpop.f32.mrf.mxu0
  %v250 = vadd.f32 0.0, %v249
  %v251 = vpop.f32.mrf.mxu0
  %v252 = vadd.f32 0.0, %v251
  %253 = vmatmul.bf16.gmra.mxu0 %v214
  %v254 = vpop.f32.mrf.mxu0
  %v255 = vadd.f32 0.0, %v254
  %v256 = vpop.f32.mrf.mxu0
  %v257 = vadd.f32 0.0, %v256
  %258 = vmatmul.bf16.gmra.mxu0 %v217
  %v259 = vpop.f32.mrf.mxu0
  %v260 = vadd.f32 0.0, %v259
  %v261 = vpop.f32.mrf.mxu0
  %v262 = vadd.f32 0.0, %v261
  %263 = vmatmul.bf16.gmra.mxu0 %v220
  %v264 = vpop.f32.mrf.mxu0
  %v265 = vadd.f32 0.0, %v264
  %v266 = vpop.f32.mrf.mxu0
  %v267 = vadd.f32 0.0, %v266
  %268 = vmatmul.bf16.gmra.mxu0 %v223
  %v269 = vpop.f32.mrf.mxu0
  %v270 = vadd.f32 0.0, %v269
  %v271 = vpop.f32.mrf.mxu0
  %v272 = vadd.f32 0.0, %v271
  %273 = vmatmul.bf16.gmra.mxu0 %v226
  %v274 = vpop.f32.mrf.mxu0
  %v275 = vadd.f32 0.0, %v274
  %v276 = vpop.f32.mrf.mxu0
  %v277 = vadd.f32 0.0, %v276
  %278 = vmatmul.bf16.gmra.mxu0 %v229
  %v279 = vpop.f32.mrf.mxu0
  %v280 = vadd.f32 0.0, %v279
  %v281 = vpop.f32.mrf.mxu0
  %v282 = vadd.f32 0.0, %v281
  %283 = vdwg.mxu0
  %v285 = vperm.slane %v54, 0
  %v291 = vunpack.c.l.b16 %v161
  %v292 = vunpack.c.l.b16 %v162
  %v293 = vunpack.c.l.b16 %v163
  %v294 = vunpack.c.l.b16 %v164
  %v295 = vpack.c.b16 %v292, %v291
  %v296 = vpack.c.b16 %v294, %v293
  %299 = vmatpush.bf16.msra.mxu0 0
  %300 = vmatpush.bf16.msra.mxu0 0
  %301 = vmatpush.bf16.msra.mxu0 0
  %302 = vmatpush.bf16.msra.mxu0 0
  %303 = vmatpush.bf16.msra.mxu0 0
  %304 = vmatpush.bf16.msra.mxu0 0
  %305 = vmatpush.bf16.msra.mxu0 %v296
  %306 = vmatpush.bf16.msra.mxu0 %v295
  %307 = vmatmul.bf16.gmra.mxu0 %v73
  %v308 = vpop.f32.mrf.mxu0
  %v309 = vadd.f32 %v285, %v308
  %v310 = vpop.f32.mrf.mxu0
  %v311 = vadd.f32 %v285, %v310
  %312 = vmatmul.bf16.gmra.mxu0 %v76
  %v313 = vpop.f32.mrf.mxu0
  %v314 = vadd.f32 %v285, %v313
  %v315 = vpop.f32.mrf.mxu0
  %v316 = vadd.f32 %v285, %v315
  %317 = vmatmul.bf16.gmra.mxu0 %v79
  %v318 = vpop.f32.mrf.mxu0
  %v319 = vadd.f32 %v285, %v318
  %v320 = vpop.f32.mrf.mxu0
  %v321 = vadd.f32 %v285, %v320
  %322 = vmatmul.bf16.gmra.mxu0 %v82
  %v323 = vpop.f32.mrf.mxu0
  %v324 = vadd.f32 %v285, %v323
  %v325 = vpop.f32.mrf.mxu0
  %v326 = vadd.f32 %v285, %v325
  %327 = vmatmul.bf16.gmra.mxu0 %v85
  %v328 = vpop.f32.mrf.mxu0
  %v329 = vadd.f32 %v285, %v328
  %v330 = vpop.f32.mrf.mxu0
  %v331 = vadd.f32 %v285, %v330
  %332 = vmatmul.bf16.gmra.mxu0 %v88
  %v333 = vpop.f32.mrf.mxu0
  %v334 = vadd.f32 %v285, %v333
  %v335 = vpop.f32.mrf.mxu0
  %v336 = vadd.f32 %v285, %v335
  %337 = vmatmul.bf16.gmra.mxu0 %v91
  %v338 = vpop.f32.mrf.mxu0
  %v339 = vadd.f32 %v285, %v338
  %v340 = vpop.f32.mrf.mxu0
  %v341 = vadd.f32 %v285, %v340
  %342 = vmatmul.bf16.gmra.mxu0 %v94
  %v343 = vpop.f32.mrf.mxu0
  %v344 = vadd.f32 %v285, %v343
  %v345 = vpop.f32.mrf.mxu0
  %v346 = vadd.f32 %v285, %v345
  %347 = vdwg.mxu0
  %v348 = vadd.f32 %v309, %v245
  %v349 = vadd.f32 %v311, %v247
  %v350 = vadd.f32 %v314, %v250
  %v351 = vadd.f32 %v316, %v252
  %v352 = vadd.f32 %v319, %v255
  %v353 = vadd.f32 %v321, %v257
  %v354 = vadd.f32 %v324, %v260
  %v355 = vadd.f32 %v326, %v262
  %v356 = vadd.f32 %v329, %v265
  %v357 = vadd.f32 %v331, %v267
  %v358 = vadd.f32 %v334, %v270
  %v359 = vadd.f32 %v336, %v272
  %v360 = vadd.f32 %v339, %v275
  %v361 = vadd.f32 %v341, %v277
  %v362 = vadd.f32 %v344, %v280
  %v363 = vadd.f32 %v346, %v282
  %364 = vst.msk [vmem:[%s8] sm:$0xff] %vm71, %v348
  %365 = vst.msk [vmem:[%s8 + $0x8] sm:$0xff] %vm71, %v349
  %366 = vst.msk [vmem:[%s8 + $0x10] sm:$0xff] %vm71, %v350
  %367 = vst.msk [vmem:[%s8 + $0x18] sm:$0xff] %vm71, %v351
  %368 = vst.msk [vmem:[%s8 + $0x20] sm:$0xff] %vm71, %v352
  %369 = vst.msk [vmem:[%s8 + $0x28] sm:$0xff] %vm71, %v353
  %370 = vst.msk [vmem:[%s8 + $0x30] sm:$0xff] %vm71, %v354
  %371 = vst.msk [vmem:[%s8 + $0x38] sm:$0xff] %vm71, %v355
  %372 = vst.msk [vmem:[%s8 + $0x40] sm:$0xff] %vm71, %v356
  %373 = vst.msk [vmem:[%s8 + $0x48] sm:$0xff] %vm71, %v357
  %374 = vst.msk [vmem:[%s8 + $0x50] sm:$0xff] %vm71, %v358
  %375 = vst.msk [vmem:[%s8 + $0x58] sm:$0xff] %vm71, %v359
  %376 = vst.msk [vmem:[%s8 + $0x60] sm:$0xff] %vm71, %v360
  %377 = vst.msk [vmem:[%s8 + $0x68] sm:$0xff] %vm71, %v361
  %378 = vst.msk [vmem:[%s8 + $0x70] sm:$0xff] %vm71, %v362
  %379 = vst.msk [vmem:[%s8 + $0x78] sm:$0xff] %vm71, %v363
  %v380 = vld [vmem:[%s2] sm:$0xf]
  %v381 = vld [vmem:[%s2 + $0x4] sm:$0xf]
  %v382 = vld [vmem:[%s2 + $0x8] sm:$0xf]
  %v383 = vld [vmem:[%s2 + $0xc] sm:$0xf]
  %v388 = vunpack.c.l.b16 %v380
  %v389 = vunpack.c.l.b16 %v381
  %v390 = vunpack.c.l.b16 %v382
  %v391 = vunpack.c.l.b16 %v383
  %v392 = vpack.c.b16 %v389, %v388
  %v393 = vpack.c.b16 %v391, %v390
  %396 = vrot.lane.b32.xlu0 %v285, 96
  %v397 = vpop.permute.xlu0 %396
  %399 = vmatpush.bf16.msra.mxu0 0
  %400 = vmatpush.bf16.msra.mxu0 0
  %401 = vmatpush.bf16.msra.mxu0 0
  %402 = vmatpush.bf16.msra.mxu0 0
  %403 = vmatpush.bf16.msra.mxu0 0
  %404 = vmatpush.bf16.msra.mxu0 0
  %405 = vmatpush.bf16.msra.mxu0 %v393
  %406 = vmatpush.bf16.msra.mxu0 %v392
  %407 = vmatmul.bf16.gmra.mxu0 %v73
  %v408 = vpop.f32.mrf.mxu0
  %v409 = vadd.f32 %v397, %v408
  %v410 = vpop.f32.mrf.mxu0
  %v411 = vadd.f32 %v397, %v410
  %412 = vmatmul.bf16.gmra.mxu0 %v76
  %v413 = vpop.f32.mrf.mxu0
  %v414 = vadd.f32 %v397, %v413
  %v415 = vpop.f32.mrf.mxu0
  %v416 = vadd.f32 %v397, %v415
  %417 = vmatmul.bf16.gmra.mxu0 %v79
  %v418 = vpop.f32.mrf.mxu0
  %v419 = vadd.f32 %v397, %v418
  %v420 = vpop.f32.mrf.mxu0
  %v421 = vadd.f32 %v397, %v420
  %422 = vmatmul.bf16.gmra.mxu0 %v82
  %v423 = vpop.f32.mrf.mxu0
  %v424 = vadd.f32 %v397, %v423
  %v425 = vpop.f32.mrf.mxu0
  %v426 = vadd.f32 %v397, %v425
  %427 = vmatmul.bf16.gmra.mxu0 %v85
  %v428 = vpop.f32.mrf.mxu0
  %v429 = vadd.f32 %v397, %v428
  %v430 = vpop.f32.mrf.mxu0
  %v431 = vadd.f32 %v397, %v430
  %432 = vmatmul.bf16.gmra.mxu0 %v88
  %v433 = vpop.f32.mrf.mxu0
  %v434 = vadd.f32 %v397, %v433
  %v435 = vpop.f32.mrf.mxu0
  %v436 = vadd.f32 %v397, %v435
  %437 = vmatmul.bf16.gmra.mxu0 %v91
  %v438 = vpop.f32.mrf.mxu0
  %v439 = vadd.f32 %v397, %v438
  %v440 = vpop.f32.mrf.mxu0
  %v441 = vadd.f32 %v397, %v440
  %442 = vmatmul.bf16.gmra.mxu0 %v94
  %v443 = vpop.f32.mrf.mxu0
  %v444 = vadd.f32 %v397, %v443
  %v445 = vpop.f32.mrf.mxu0
  %v446 = vadd.f32 %v397, %v445
  %447 = vdwg.mxu0
  %464 = vrot.lane.b32.xlu0 %v409, 32
  %v465 = vpop.permute.xlu0 %464
  %466 = vrot.lane.b32.xlu0 %v411, 32
  %v467 = vpop.permute.xlu0 %466
  %468 = vrot.lane.b32.xlu0 %v414, 32
  %v469 = vpop.permute.xlu0 %468
  %470 = vrot.lane.b32.xlu0 %v416, 32
  %v471 = vpop.permute.xlu0 %470
  %472 = vrot.lane.b32.xlu0 %v419, 32
  %v473 = vpop.permute.xlu0 %472
  %474 = vrot.lane.b32.xlu0 %v421, 32
  %v475 = vpop.permute.xlu0 %474
  %476 = vrot.lane.b32.xlu0 %v424, 32
  %v477 = vpop.permute.xlu0 %476
  %478 = vrot.lane.b32.xlu0 %v426, 32
  %v479 = vpop.permute.xlu0 %478
  %480 = vrot.lane.b32.xlu0 %v429, 32
  %v481 = vpop.permute.xlu0 %480
  %482 = vrot.lane.b32.xlu0 %v431, 32
  %v483 = vpop.permute.xlu0 %482
  %484 = vrot.lane.b32.xlu0 %v434, 32
  %v485 = vpop.permute.xlu0 %484
  %486 = vrot.lane.b32.xlu0 %v436, 32
  %v487 = vpop.permute.xlu0 %486
  %488 = vrot.lane.b32.xlu0 %v439, 32
  %v489 = vpop.permute.xlu0 %488
  %490 = vrot.lane.b32.xlu0 %v441, 32
  %v491 = vpop.permute.xlu0 %490
  %492 = vrot.lane.b32.xlu0 %v444, 32
  %v493 = vpop.permute.xlu0 %492
  %494 = vrot.lane.b32.xlu0 %v446, 32
  %v495 = vpop.permute.xlu0 %494
  %vm512 = vcmask 523520
  %513 = vst.msk [vmem:[%s8] sm:$0xff] %vm512, %v465
  %514 = vst.msk [vmem:[%s8 + $0x8] sm:$0xff] %vm512, %v467
  %515 = vst.msk [vmem:[%s8 + $0x10] sm:$0xff] %vm512, %v469
  %516 = vst.msk [vmem:[%s8 + $0x18] sm:$0xff] %vm512, %v471
  %517 = vst.msk [vmem:[%s8 + $0x20] sm:$0xff] %vm512, %v473
  %518 = vst.msk [vmem:[%s8 + $0x28] sm:$0xff] %vm512, %v475
  %519 = vst.msk [vmem:[%s8 + $0x30] sm:$0xff] %vm512, %v477
  %520 = vst.msk [vmem:[%s8 + $0x38] sm:$0xff] %vm512, %v479
  %521 = vst.msk [vmem:[%s8 + $0x40] sm:$0xff] %vm512, %v481
  %522 = vst.msk [vmem:[%s8 + $0x48] sm:$0xff] %vm512, %v483
  %523 = vst.msk [vmem:[%s8 + $0x50] sm:$0xff] %vm512, %v485
  %524 = vst.msk [vmem:[%s8 + $0x58] sm:$0xff] %vm512, %v487
  %525 = vst.msk [vmem:[%s8 + $0x60] sm:$0xff] %vm512, %v489
  %526 = vst.msk [vmem:[%s8 + $0x68] sm:$0xff] %vm512, %v491
  %527 = vst.msk [vmem:[%s8 + $0x70] sm:$0xff] %vm512, %v493
  %528 = vst.msk [vmem:[%s8 + $0x78] sm:$0xff] %vm512, %v495
  %v529 = vld [vmem:[%s3] sm:$0xf]
  %v530 = vld [vmem:[%s3 + $0x4] sm:$0xf]
  %v531 = vld [vmem:[%s3 + $0x8] sm:$0xf]
  %v532 = vld [vmem:[%s3 + $0xc] sm:$0xf]
  %v533 = vld [vmem:[%s7] sm:$0x3]
  %534 = vrot.lane.b32.xlu0 %v198, 124
  %v535 = vpop.permute.xlu0 %534
  %536 = vrot.lane.b32.xlu0 %v199, 124
  %v537 = vpop.permute.xlu0 %536
  %538 = vrot.lane.b32.xlu0 %v200, 124
  %v539 = vpop.permute.xlu0 %538
  %540 = vrot.lane.b32.xlu0 %v201, 124
  %v541 = vpop.permute.xlu0 %540
  %542 = vrot.lane.b32.xlu0 %v202, 124
  %v543 = vpop.permute.xlu0 %542
  %544 = vrot.lane.b32.xlu0 %v203, 124
  %v545 = vpop.permute.xlu0 %544
  %546 = vrot.lane.b32.xlu0 %v204, 124
  %v547 = vpop.permute.xlu0 %546
  %548 = vrot.lane.b32.xlu0 %v205, 124
  %v549 = vpop.permute.xlu0 %548
  %v551 = vsel %vm206, %v535, 0
  %v554 = vsel %vm206, %v537, 0
  %v557 = vsel %vm206, %v539, 0
  %v560 = vsel %vm206, %v541, 0
  %v563 = vsel %vm206, %v543, 0
  %v566 = vsel %vm206, %v545, 0
  %v569 = vsel %vm206, %v547, 0
  %v572 = vsel %vm206, %v549, 0
  %v575 = vsel %vm231, %v533, 0
  %577 = vmatpush.bf16.msra.mxu0 0
  %578 = vmatpush.bf16.msra.mxu0 0
  %579 = vmatpush.bf16.msra.mxu0 0
  %580 = vmatpush.bf16.msra.mxu0 0
  %581 = vmatpush.bf16.msra.mxu0 0
  %582 = vmatpush.bf16.msra.mxu0 0
  %583 = vmatpush.bf16.msra.mxu0 0
  %584 = vmatpush.bf16.msra.mxu0 %v575
  %585 = vmatmul.bf16.gmra.mxu0 %v551
  %v586 = vpop.f32.mrf.mxu0
  %v587 = vadd.f32 0.0, %v586
  %v588 = vpop.f32.mrf.mxu0
  %v589 = vadd.f32 0.0, %v588
  %590 = vmatmul.bf16.gmra.mxu0 %v554
  %v591 = vpop.f32.mrf.mxu0
  %v592 = vadd.f32 0.0, %v591
  %v593 = vpop.f32.mrf.mxu0
  %v594 = vadd.f32 0.0, %v593
  %595 = vmatmul.bf16.gmra.mxu0 %v557
  %v596 = vpop.f32.mrf.mxu0
  %v597 = vadd.f32 0.0, %v596
  %v598 = vpop.f32.mrf.mxu0
  %v599 = vadd.f32 0.0, %v598
  %600 = vmatmul.bf16.gmra.mxu0 %v560
  %v601 = vpop.f32.mrf.mxu0
  %v602 = vadd.f32 0.0, %v601
  %v603 = vpop.f32.mrf.mxu0
  %v604 = vadd.f32 0.0, %v603
  %605 = vmatmul.bf16.gmra.mxu0 %v563
  %v606 = vpop.f32.mrf.mxu0
  %v607 = vadd.f32 0.0, %v606
  %v608 = vpop.f32.mrf.mxu0
  %v609 = vadd.f32 0.0, %v608
  %610 = vmatmul.bf16.gmra.mxu0 %v566
  %v611 = vpop.f32.mrf.mxu0
  %v612 = vadd.f32 0.0, %v611
  %v613 = vpop.f32.mrf.mxu0
  %v614 = vadd.f32 0.0, %v613
  %615 = vmatmul.bf16.gmra.mxu0 %v569
  %v616 = vpop.f32.mrf.mxu0
  %v617 = vadd.f32 0.0, %v616
  %v618 = vpop.f32.mrf.mxu0
  %v619 = vadd.f32 0.0, %v618
  %620 = vmatmul.bf16.gmra.mxu0 %v572
  %v621 = vpop.f32.mrf.mxu0
  %v622 = vadd.f32 0.0, %v621
  %v623 = vpop.f32.mrf.mxu0
  %v624 = vadd.f32 0.0, %v623
  %625 = vdwg.mxu0
  %v630 = vunpack.c.l.b16 %v529
  %v631 = vunpack.c.l.b16 %v530
  %v632 = vunpack.c.l.b16 %v531
  %v633 = vunpack.c.l.b16 %v532
  %v634 = vpack.c.b16 %v631, %v630
  %v635 = vpack.c.b16 %v633, %v632
  %638 = vrot.lane.b32.xlu0 %v285, 64
  %v639 = vpop.permute.xlu0 %638
  %641 = vmatpush.bf16.msra.mxu0 0
  %642 = vmatpush.bf16.msra.mxu0 0
  %643 = vmatpush.bf16.msra.mxu0 0
  %644 = vmatpush.bf16.msra.mxu0 0
  %645 = vmatpush.bf16.msra.mxu0 0
  %646 = vmatpush.bf16.msra.mxu0 0
  %647 = vmatpush.bf16.msra.mxu0 %v635
  %648 = vmatpush.bf16.msra.mxu0 %v634
  %649 = vmatmul.bf16.gmra.mxu0 %v73
  %v650 = vpop.f32.mrf.mxu0
  %v651 = vadd.f32 %v639, %v650
  %v652 = vpop.f32.mrf.mxu0
  %v653 = vadd.f32 %v639, %v652
  %654 = vmatmul.bf16.gmra.mxu0 %v76
  %v655 = vpop.f32.mrf.mxu0
  %v656 = vadd.f32 %v639, %v655
  %v657 = vpop.f32.mrf.mxu0
  %v658 = vadd.f32 %v639, %v657
  %659 = vmatmul.bf16.gmra.mxu0 %v79
  %v660 = vpop.f32.mrf.mxu0
  %v661 = vadd.f32 %v639, %v660
  %v662 = vpop.f32.mrf.mxu0
  %v663 = vadd.f32 %v639, %v662
  %664 = vmatmul.bf16.gmra.mxu0 %v82
  %v665 = vpop.f32.mrf.mxu0
  %v666 = vadd.f32 %v639, %v665
  %v667 = vpop.f32.mrf.mxu0
  %v668 = vadd.f32 %v639, %v667
  %669 = vmatmul.bf16.gmra.mxu0 %v85
  %v670 = vpop.f32.mrf.mxu0
  %v671 = vadd.f32 %v639, %v670
  %v672 = vpop.f32.mrf.mxu0
  %v673 = vadd.f32 %v639, %v672
  %674 = vmatmul.bf16.gmra.mxu0 %v88
  %v675 = vpop.f32.mrf.mxu0
  %v676 = vadd.f32 %v639, %v675
  %v677 = vpop.f32.mrf.mxu0
  %v678 = vadd.f32 %v639, %v677
  %679 = vmatmul.bf16.gmra.mxu0 %v91
  %v680 = vpop.f32.mrf.mxu0
  %v681 = vadd.f32 %v639, %v680
  %v682 = vpop.f32.mrf.mxu0
  %v683 = vadd.f32 %v639, %v682
  %684 = vmatmul.bf16.gmra.mxu0 %v94
  %v685 = vpop.f32.mrf.mxu0
  %v686 = vadd.f32 %v639, %v685
  %v687 = vpop.f32.mrf.mxu0
  %v688 = vadd.f32 %v639, %v687
  %689 = vdwg.mxu0
  %v690 = vadd.f32 %v651, %v587
  %v691 = vadd.f32 %v653, %v589
  %v692 = vadd.f32 %v656, %v592
  %v693 = vadd.f32 %v658, %v594
  %v694 = vadd.f32 %v661, %v597
  %v695 = vadd.f32 %v663, %v599
  %v696 = vadd.f32 %v666, %v602
  %v697 = vadd.f32 %v668, %v604
  %v698 = vadd.f32 %v671, %v607
  %v699 = vadd.f32 %v673, %v609
  %v700 = vadd.f32 %v676, %v612
  %v701 = vadd.f32 %v678, %v614
  %v702 = vadd.f32 %v681, %v617
  %v703 = vadd.f32 %v683, %v619
  %v704 = vadd.f32 %v686, %v622
  %v705 = vadd.f32 %v688, %v624
  %722 = vrot.lane.b32.xlu0 %v690, 64
  %v723 = vpop.permute.xlu0 %722
  %724 = vrot.lane.b32.xlu0 %v691, 64
  %v725 = vpop.permute.xlu0 %724
  %726 = vrot.lane.b32.xlu0 %v692, 64
  %v727 = vpop.permute.xlu0 %726
  %728 = vrot.lane.b32.xlu0 %v693, 64
  %v729 = vpop.permute.xlu0 %728
  %730 = vrot.lane.b32.xlu0 %v694, 64
  %v731 = vpop.permute.xlu0 %730
  %732 = vrot.lane.b32.xlu0 %v695, 64
  %v733 = vpop.permute.xlu0 %732
  %734 = vrot.lane.b32.xlu0 %v696, 64
  %v735 = vpop.permute.xlu0 %734
  %736 = vrot.lane.b32.xlu0 %v697, 64
  %v737 = vpop.permute.xlu0 %736
  %738 = vrot.lane.b32.xlu0 %v698, 64
  %v739 = vpop.permute.xlu0 %738
  %740 = vrot.lane.b32.xlu0 %v699, 64
  %v741 = vpop.permute.xlu0 %740
  %742 = vrot.lane.b32.xlu0 %v700, 64
  %v743 = vpop.permute.xlu0 %742
  %744 = vrot.lane.b32.xlu0 %v701, 64
  %v745 = vpop.permute.xlu0 %744
  %746 = vrot.lane.b32.xlu0 %v702, 64
  %v747 = vpop.permute.xlu0 %746
  %748 = vrot.lane.b32.xlu0 %v703, 64
  %v749 = vpop.permute.xlu0 %748
  %750 = vrot.lane.b32.xlu0 %v704, 64
  %v751 = vpop.permute.xlu0 %750
  %752 = vrot.lane.b32.xlu0 %v705, 64
  %v753 = vpop.permute.xlu0 %752
  %vm770 = vcmask 785920
  %771 = vst.msk [vmem:[%s8] sm:$0xff] %vm770, %v723
  %772 = vst.msk [vmem:[%s8 + $0x8] sm:$0xff] %vm770, %v725
  %773 = vst.msk [vmem:[%s8 + $0x10] sm:$0xff] %vm770, %v727
  %774 = vst.msk [vmem:[%s8 + $0x18] sm:$0xff] %vm770, %v729
  %775 = vst.msk [vmem:[%s8 + $0x20] sm:$0xff] %vm770, %v731
  %776 = vst.msk [vmem:[%s8 + $0x28] sm:$0xff] %vm770, %v733
  %777 = vst.msk [vmem:[%s8 + $0x30] sm:$0xff] %vm770, %v735
  %778 = vst.msk [vmem:[%s8 + $0x38] sm:$0xff] %vm770, %v737
  %779 = vst.msk [vmem:[%s8 + $0x40] sm:$0xff] %vm770, %v739
  %780 = vst.msk [vmem:[%s8 + $0x48] sm:$0xff] %vm770, %v741
  %781 = vst.msk [vmem:[%s8 + $0x50] sm:$0xff] %vm770, %v743
  %782 = vst.msk [vmem:[%s8 + $0x58] sm:$0xff] %vm770, %v745
  %783 = vst.msk [vmem:[%s8 + $0x60] sm:$0xff] %vm770, %v747
  %784 = vst.msk [vmem:[%s8 + $0x68] sm:$0xff] %vm770, %v749
  %785 = vst.msk [vmem:[%s8 + $0x70] sm:$0xff] %vm770, %v751
  %786 = vst.msk [vmem:[%s8 + $0x78] sm:$0xff] %vm770, %v753
  // Predicated region
  $region34: #{tpu_custom_call.1} parent=0 // pred_check
    _
  $region35: #{tpu_custom_call.1} parent=0 // pred_check_branch
    %788 = sbr.rel (0) target = $region37
  $region36: #{tpu_custom_call.1} parent=0 // pred_region
    _
  $region37: #{tpu_custom_call.1} parent=0 // pred_fallthru
    _
  // Predicated region
  $region38: #{tpu_custom_call.1} parent=0 // pred_check
    _
  $region39: #{tpu_custom_call.1} parent=0 // pred_check_branch
    %790 = sbr.rel (0) target = $region41
  $region40: #{tpu_custom_call.1} parent=0 // pred_region
    _
  $region41: #{tpu_custom_call.1} parent=0 // pred_fallthru
    _

</llo_original>
